<compile_context>
chip_gen: v7x
topology: tpu7x:2x2x1
jax: 0.10.0
libtpu: 0.0.40
codegen_flags: <defaults>
</compile_context>

<pallas_src>
import functools

import numpy as np

import jax
import jax.numpy as jnp
from jax.experimental import pallas as pl
from jax.experimental.pallas import tpu as pltpu


def _double_conv_kernel(x_ref, a1_ref, scale_ref, shift_ref, a2_ref, b2_ref,
                        o_ref, *, H):
    # x_ref:     (TM, W*Cin)          bf16  rows of k images (TM = k*H)
    # a1_ref:    (3*W*Cin, W*Cout)    bf16  stacked banded conv1 weights
    # scale_ref: (1, W*Cout)          f32   BN scale, tiled over w
    # shift_ref: (1, W*Cout)          f32   BN shift with conv1 bias folded in
    # a2_ref:    (3*W*Cout, W*Cout)   bf16  stacked banded conv2 weights
    # b2_ref:    (1, W*Cout)          f32   conv2 bias, tiled over w
    # o_ref:     (TM, W*Cout)
    TM = o_ref.shape[0]

    # Per-image boundary masks from a (TM, 1) iota, built once and reused by
    # both convs (broadcast inside the selects).
    row_in_img = jax.lax.broadcasted_iota(jnp.int32, (TM, 1), 0) % H
    first_row = row_in_img == 0
    last_row = row_in_img == (H - 1)

    def stack_shifted(t):
        # t: (TM, K) f32 -> (TM, 3K) bf16 = [t[h-1] | t[h] | t[h+1]] with zero
        # rows at image boundaries (the conv's dy = -1/0/+1 taps).  Rolls stay
        # within the tile; the wrapped rows are exactly the masked ones.
        prev = jnp.where(first_row, 0.0, pltpu.roll(t, 1, axis=0))
        nxt = jnp.where(last_row, 0.0, pltpu.roll(t, TM - 1, axis=0))
        return jnp.concatenate([prev, t, nxt], axis=-1).astype(jnp.bfloat16)

    # ---- conv1: one stacked-K matmul (K = 3*W*Cin) ----
    xf = x_ref[...].astype(jnp.float32)
    pre1 = jnp.dot(stack_shifted(xf), a1_ref[...],
                   preferred_element_type=jnp.float32)

    # Eval-mode BatchNorm (conv1 bias folded into shift) + ReLU, f32 on VPU.
    h1 = jnp.maximum(pre1 * scale_ref[...] + shift_ref[...], 0.0)

    # ---- conv2: one stacked-K matmul (K = 3*W*Cout) ----
    pre2 = jnp.dot(stack_shifted(h1), a2_ref[...],
                   preferred_element_type=jnp.float32)
    o_ref[...] = jnp.maximum(pre2 + b2_ref[...], 0.0).astype(o_ref.dtype)


def _band_matrices(wk, W):
    """wk: (Cout, Cin, 3, 3) PyTorch-layout conv weight.
    Returns (3, W*Cin, W*Cout) f32: for kernel row d,
      A[d, s*Cin+ci, w*Cout+co] = wk[co, ci, d, e]  where s = w + e - 1 in range,
    i.e. the dx taps and left/right zero-padding folded into a banded matrix."""
    Cout, Cin = wk.shape[0], wk.shape[1]
    P = np.zeros((3, W, W), np.float32)
    for e in range(3):
        for w in range(W):
            s = w + e - 1
            if 0 <= s < W:
                P[e, s, w] = 1.0
    A = jnp.einsum('esw,oide->dsiwo', jnp.asarray(P), wk.astype(jnp.float32),
                   precision=jax.lax.Precision.HIGHEST)
    return A.reshape(3, W * Cin, W * Cout)


def _pick_rows_per_tile(N, H, target_rows=512):
    """Largest TM = k*H with k | N, TM <= ~target_rows and TM % 8 == 0
    (sublane rule); falls back to the whole batch (block == full array)."""
    k_cap = max(1, target_rows // H)
    best = N
    for cand in range(1, min(N, k_cap) + 1):
        if N % cand == 0 and (cand * H) % 8 == 0:
            best = cand
    return best * H


def double_conv_rows(x_rows, H, W, w1, b1, bn_gamma, bn_beta, bn_mean, bn_var,
                     w2, b2, eps=1e-5, out_dtype=jnp.float32):
    """Row-layout entry point: layout-stable pipelines call this directly and
    skip the NCHW<->rows transposes.  x_rows: (N*H, W*Cin), lane = w*Cin + ci.
    Returns (N*H, W*Cout) in out_dtype (use bf16 on v5e to halve writeback)."""
    Cout, Cin = w1.shape[0], w1.shape[1]
    M = x_rows.shape[0]
    N = M // H
    WCi, WCo = W * Cin, W * Cout
    TM = _pick_rows_per_tile(N, H)

    x_rows = x_rows.astype(jnp.bfloat16)

    # Banded ("block-Toeplitz") weights with dx taps + left/right zero padding
    # folded in, stacked along K over the 3 dy taps:
    #   out[h] = [x[h-1] | x[h] | x[h+1]] @ A_stacked
    A1 = _band_matrices(w1, W).reshape(3 * WCi, WCo).astype(jnp.bfloat16)
    A2 = _band_matrices(w2, W).reshape(3 * WCo, WCo).astype(jnp.bfloat16)

    # Eval-mode BN and conv1 bias folded into one per-channel affine, tiled
    # across W so it is a per-lane vector of width W*Cout.
    scale = bn_gamma / jnp.sqrt(bn_var + eps)
    shift = b1 * scale + (bn_beta - bn_mean * scale)
    scale_l = jnp.tile(scale, W).reshape(1, WCo).astype(jnp.float32)
    shift_l = jnp.tile(shift, W).reshape(1, WCo).astype(jnp.float32)
    b2_l = jnp.tile(b2, W).reshape(1, WCo).astype(jnp.float32)

    kernel = functools.partial(_double_conv_kernel, H=H)
    return pl.pallas_call(
        kernel,
        out_shape=jax.ShapeDtypeStruct((M, WCo), out_dtype),
        grid_spec=pltpu.PrefetchScalarGridSpec(
            num_scalar_prefetch=0,
            grid=(M // TM,),
            in_specs=[
                pl.BlockSpec((TM, WCi), lambda i: (i, 0)),
                pl.BlockSpec((3 * WCi, WCo), lambda i: (0, 0)),
                pl.BlockSpec((1, WCo), lambda i: (0, 0)),
                pl.BlockSpec((1, WCo), lambda i: (0, 0)),
                pl.BlockSpec((3 * WCo, WCo), lambda i: (0, 0)),
                pl.BlockSpec((1, WCo), lambda i: (0, 0)),
            ],
            out_specs=pl.BlockSpec((TM, WCo), lambda i: (i, 0)),
        ),
        compiler_params=pltpu.CompilerParams(
            dimension_semantics=("parallel",),
            vmem_limit_bytes=64 * 1024 * 1024),
    )(x_rows, A1, scale_l, shift_l, A2, b2_l)


@jax.jit
def double_conv(x_nchw, w1, b1, bn_gamma, bn_beta, bn_mean, bn_var, w2, b2,
                eps=1e-5):
    """x_nchw: (N, Cin, H, W) f32.  Conv weights in PyTorch OIHW layout.
    Returns (N, Cout, H, W) f32 (eval-mode BatchNorm, dropout p=0)."""
    N, Cin, H, W = x_nchw.shape
    Cout = w1.shape[0]
    # NCHW -> (N*H, W*Cin) rows; the bf16 cast fuses into this transpose so the
    # f32 input makes a single HBM round trip outside the kernel.
    x_rows = (jnp.transpose(x_nchw, (0, 2, 3, 1))
              .reshape(N * H, W * Cin).astype(jnp.bfloat16))
    out_rows = double_conv_rows(x_rows, H, W, w1, b1, bn_gamma, bn_beta,
                                bn_mean, bn_var, w2, b2, eps=eps,
                                out_dtype=jnp.float32)
    # (N*H, W*Cout) -> (N, Cout, H, W) to match the PyTorch module's layout.
    return jnp.transpose(out_rows.reshape(N, H, W, Cout), (0, 3, 1, 2))


def _reference(x_nchw, w1, b1, bn_gamma, bn_beta, bn_mean, bn_var, w2, b2,
               eps=1e-5):
    dn = jax.lax.conv_dimension_numbers(x_nchw.shape, w1.shape,
                                        ("NCHW", "OIHW", "NCHW"))
    h = jax.lax.conv_general_dilated(x_nchw, w1, (1, 1), "SAME",
                                     dimension_numbers=dn)
    h = h + b1[None, :, None, None]
    scale = bn_gamma / jnp.sqrt(bn_var + eps)
    shift = bn_beta - bn_mean * scale
    h = h * scale[None, :, None, None] + shift[None, :, None, None]
    h = jnp.maximum(h, 0.0)
    h = jax.lax.conv_general_dilated(h, w2, (1, 1), "SAME",
                                     dimension_numbers=dn)
    h = h + b2[None, :, None, None]
    return jnp.maximum(h, 0.0)


if __name__ == "__main__":
    key = jax.random.PRNGKey(0)
    N, Cin, Cout, H, W = 2, 4, 8, 16, 16

    ks = jax.random.split(key, 9)
    x = jax.random.normal(ks[0], (N, Cin, H, W), jnp.float32)

    # Conv weights / biases (PyTorch OIHW layout).
    w1 = jax.random.normal(ks[1], (Cout, Cin, 3, 3), jnp.float32) * 0.1
    b1 = jax.random.normal(ks[2], (Cout,), jnp.float32) * 0.1
    w2 = jax.random.normal(ks[3], (Cout, Cout, 3, 3), jnp.float32) * 0.1
    b2 = jax.random.normal(ks[4], (Cout,), jnp.float32) * 0.1

    # Non-trivial eval-mode BatchNorm parameters (exercises the BN fold).
    bn_gamma = 1.0 + 0.2 * jax.random.normal(ks[5], (Cout,), jnp.float32)
    bn_beta = 0.1 * jax.random.normal(ks[6], (Cout,), jnp.float32)
    bn_mean = 0.1 * jax.random.normal(ks[7], (Cout,), jnp.float32)
    bn_var = 1.0 + 0.2 * jax.random.uniform(ks[8], (Cout,), jnp.float32)

    out = double_conv(x, w1, b1, bn_gamma, bn_beta, bn_mean, bn_var, w2, b2)
    out = jax.block_until_ready(out)

    ref = _reference(x, w1, b1, bn_gamma, bn_beta, bn_mean, bn_var, w2, b2)
    assert out.shape == (N, Cout, H, W)
    # bf16 MXU operands (f32 accumulation) -> ~1e-2-level absolute error at
    # these magnitudes; 5e-2 gives comfortable deterministic margin.
    err = float(jnp.max(jnp.abs(out - ref)))
    assert err < 5e-2, err

    print("KERNEL_OK")
</pallas_src>

<mosaic_0001>
module attributes {stable_mosaic.version = 11 : i64} {
  func.func @_double_conv_kernel(%arg0: i32, %arg1: memref<32x64xbf16, #tpu.memory_space<vmem>>, %arg2: memref<192x128xbf16, #tpu.memory_space<vmem>>, %arg3: memref<1x128xf32, #tpu.memory_space<vmem>>, %arg4: memref<1x128xf32, #tpu.memory_space<vmem>>, %arg5: memref<384x128xbf16, #tpu.memory_space<vmem>>, %arg6: memref<1x128xf32, #tpu.memory_space<vmem>>, %arg7: memref<32x128xf32, #tpu.memory_space<vmem>>) attributes {dimension_semantics = [#tpu.dimension_semantics<parallel>], iteration_bounds = array<i64: 1>, scalar_prefetch = 0 : i64, scratch_operands = 0 : i64, tpu.core_type = #tpu.core_type<tc>, window_params = [{transform_indices = @transform_0, window_bounds = array<i64: 32, 64>}, {pipeline_mode = #tpu.pipeline_mode<synchronous>, transform_indices = @transform_1, window_bounds = array<i64: 192, 128>}, {pipeline_mode = #tpu.pipeline_mode<synchronous>, transform_indices = @transform_2, window_bounds = array<i64: 1, 128>}, {pipeline_mode = #tpu.pipeline_mode<synchronous>, transform_indices = @transform_3, window_bounds = array<i64: 1, 128>}, {pipeline_mode = #tpu.pipeline_mode<synchronous>, transform_indices = @transform_4, window_bounds = array<i64: 384, 128>}, {pipeline_mode = #tpu.pipeline_mode<synchronous>, transform_indices = @transform_5, window_bounds = array<i64: 1, 128>}, {transform_indices = @transform_6, window_bounds = array<i64: 32, 128>}]} {
    %0 = tpu.iota {dimensions = array<i32: 0>} : vector<32x1xi32>
    %c16_i32 = arith.constant 16 : i32
    %c0_i32 = arith.constant 0 : i32
    %1 = arith.cmpi eq, %c16_i32, %c0_i32 : i32
    %c1_i32 = arith.constant 1 : i32
    %2 = arith.select %1, %c1_i32, %c16_i32 : i32
    %3 = vector.broadcast %2 : i32 to vector<32x1xi32>
    %4 = arith.remsi %0, %3 : vector<32x1xi32>
    %c0_i32_0 = arith.constant 0 : i32
    %5 = vector.broadcast %c0_i32_0 : i32 to vector<32x1xi32>
    %6 = arith.cmpi ne, %4, %5 : vector<32x1xi32>
    %c0_i32_1 = arith.constant 0 : i32
    %7 = vector.broadcast %c0_i32_1 : i32 to vector<32x1xi32>
    %8 = arith.cmpi slt, %4, %7 : vector<32x1xi32>
    %c0_i32_2 = arith.constant 0 : i32
    %9 = arith.cmpi slt, %2, %c0_i32_2 : i32
    %10 = vector.broadcast %9 : i1 to vector<32x1xi1>
    %11 = vector.broadcast %10 : vector<32x1xi1> to vector<32x1xi1>
    %12 = arith.xori %8, %11 : vector<32x1xi1>
    %13 = arith.andi %12, %6 : vector<32x1xi1>
    %14 = vector.broadcast %2 : i32 to vector<32x1xi32>
    %15 = arith.addi %4, %14 : vector<32x1xi32>
    %16 = arith.select %13, %15, %4 : vector<32x1xi1>, vector<32x1xi32>
    %c0_i32_3 = arith.constant 0 : i32
    %17 = vector.broadcast %c0_i32_3 : i32 to vector<32x1xi32>
    %18 = arith.cmpi eq, %16, %17 : vector<32x1xi32>
    %c15_i32 = arith.constant 15 : i32
    %19 = vector.broadcast %c15_i32 : i32 to vector<32x1xi32>
    %20 = arith.cmpi eq, %16, %19 : vector<32x1xi32>
    %c0 = arith.constant 0 : index
    %c0_4 = arith.constant 0 : index
    %21 = vector.load %arg1[%c0, %c0_4] : memref<32x64xbf16, #tpu.memory_space<vmem>>, vector<32x64xbf16>
    %22 = arith.extf %21 : vector<32x64xbf16> to vector<32x64xf32>
    %c1_i32_5 = arith.constant 1 : i32
    %23 = tpu.dynamic_rotate %22 by %c1_i32_5 dim 0 : vector<32x64xf32>, i32 -> vector<32x64xf32>
    %cst = arith.constant 0.000000e+00 : f32
    %24 = vector.shape_cast %18 : vector<32x1xi1> to vector<32x1xi1>
    %25 = vector.broadcast %24 : vector<32x1xi1> to vector<32x64xi1>
    %26 = vector.broadcast %cst : f32 to vector<32x64xf32>
    %27 = arith.select %25, %26, %23 : vector<32x64xi1>, vector<32x64xf32>
    %c31_i32 = arith.constant 31 : i32
    %28 = tpu.dynamic_rotate %22 by %c31_i32 dim 0 : vector<32x64xf32>, i32 -> vector<32x64xf32>
    %cst_6 = arith.constant 0.000000e+00 : f32
    %29 = vector.shape_cast %20 : vector<32x1xi1> to vector<32x1xi1>
    %30 = vector.broadcast %29 : vector<32x1xi1> to vector<32x64xi1>
    %31 = vector.broadcast %cst_6 : f32 to vector<32x64xf32>
    %32 = arith.select %30, %31, %28 : vector<32x64xi1>, vector<32x64xf32>
    %33 = tpu.concatenate %27, %22, %32 in 1 : vector<32x64xf32>, vector<32x64xf32>, vector<32x64xf32> -> vector<32x192xf32>
    %34 = arith.truncf %33 : vector<32x192xf32> to vector<32x192xbf16>
    %c0_7 = arith.constant 0 : index
    %c0_8 = arith.constant 0 : index
    %35 = vector.load %arg2[%c0_7, %c0_8] : memref<192x128xbf16, #tpu.memory_space<vmem>>, vector<192x128xbf16>
    %cst_9 = arith.constant dense<0.000000e+00> : vector<32x128xf32>
    %36 = tpu.matmul %34, %35, %cst_9 {dimension_numbers = #tpu.dot_dimension_numbers<[1], [0], [0], [1], [0, 0, 1, 1], [], []>} : vector<32x192xbf16>, vector<192x128xbf16>, vector<32x128xf32> -> vector<32x128xf32>
    %c0_10 = arith.constant 0 : index
    %c0_11 = arith.constant 0 : index
    %37 = vector.load %arg3[%c0_10, %c0_11] : memref<1x128xf32, #tpu.memory_space<vmem>>, vector<1x128xf32>
    %38 = vector.broadcast %37 : vector<1x128xf32> to vector<32x128xf32>
    %39 = arith.mulf %36, %38 : vector<32x128xf32>
    %c0_12 = arith.constant 0 : index
    %c0_13 = arith.constant 0 : index
    %40 = vector.load %arg4[%c0_12, %c0_13] : memref<1x128xf32, #tpu.memory_space<vmem>>, vector<1x128xf32>
    %41 = vector.broadcast %40 : vector<1x128xf32> to vector<32x128xf32>
    %42 = arith.addf %39, %41 : vector<32x128xf32>
    %cst_14 = arith.constant 0.000000e+00 : f32
    %43 = vector.broadcast %cst_14 : f32 to vector<32x128xf32>
    %44 = arith.maximumf %42, %43 : vector<32x128xf32>
    %c1_i32_15 = arith.constant 1 : i32
    %45 = tpu.dynamic_rotate %44 by %c1_i32_15 dim 0 : vector<32x128xf32>, i32 -> vector<32x128xf32>
    %cst_16 = arith.constant 0.000000e+00 : f32
    %46 = vector.shape_cast %18 : vector<32x1xi1> to vector<32x1xi1>
    %47 = vector.broadcast %46 : vector<32x1xi1> to vector<32x128xi1>
    %48 = vector.broadcast %cst_16 : f32 to vector<32x128xf32>
    %49 = arith.select %47, %48, %45 : vector<32x128xi1>, vector<32x128xf32>
    %c31_i32_17 = arith.constant 31 : i32
    %50 = tpu.dynamic_rotate %44 by %c31_i32_17 dim 0 : vector<32x128xf32>, i32 -> vector<32x128xf32>
    %cst_18 = arith.constant 0.000000e+00 : f32
    %51 = vector.shape_cast %20 : vector<32x1xi1> to vector<32x1xi1>
    %52 = vector.broadcast %51 : vector<32x1xi1> to vector<32x128xi1>
    %53 = vector.broadcast %cst_18 : f32 to vector<32x128xf32>
    %54 = arith.select %52, %53, %50 : vector<32x128xi1>, vector<32x128xf32>
    %55 = tpu.concatenate %49, %44, %54 in 1 : vector<32x128xf32>, vector<32x128xf32>, vector<32x128xf32> -> vector<32x384xf32>
    %56 = arith.truncf %55 : vector<32x384xf32> to vector<32x384xbf16>
    %c0_19 = arith.constant 0 : index
    %c0_20 = arith.constant 0 : index
    %57 = vector.load %arg5[%c0_19, %c0_20] : memref<384x128xbf16, #tpu.memory_space<vmem>>, vector<384x128xbf16>
    %cst_21 = arith.constant dense<0.000000e+00> : vector<32x128xf32>
    %58 = tpu.matmul %56, %57, %cst_21 {dimension_numbers = #tpu.dot_dimension_numbers<[1], [0], [0], [1], [0, 0, 1, 1], [], []>} : vector<32x384xbf16>, vector<384x128xbf16>, vector<32x128xf32> -> vector<32x128xf32>
    %c0_22 = arith.constant 0 : index
    %c0_23 = arith.constant 0 : index
    %59 = vector.load %arg6[%c0_22, %c0_23] : memref<1x128xf32, #tpu.memory_space<vmem>>, vector<1x128xf32>
    %60 = vector.broadcast %59 : vector<1x128xf32> to vector<32x128xf32>
    %61 = arith.addf %58, %60 : vector<32x128xf32>
    %cst_24 = arith.constant 0.000000e+00 : f32
    %62 = vector.broadcast %cst_24 : f32 to vector<32x128xf32>
    %63 = arith.maximumf %61, %62 : vector<32x128xf32>
    %c0_25 = arith.constant 0 : index
    %c0_26 = arith.constant 0 : index
    %64 = vector.load %arg7[%c0_25, %c0_26] : memref<32x128xf32, #tpu.memory_space<vmem>>, vector<32x128xf32>
    tpu.vector_store %arg7[%c0_25, %c0_26], %63 {strides = array<i32>} : memref<32x128xf32, #tpu.memory_space<vmem>>, vector<32x128xf32>,
    return
  }
  func.func @transform_0(%arg0: i32) -> (i32, i32) {
    %c0_i32 = arith.constant 0 : i32
    %c0_i32_0 = arith.constant 0 : i32
    return %arg0, %c0_i32 : i32, i32
  }
  func.func @transform_1(%arg0: i32) -> (i32, i32) {
    %c0_i32 = arith.constant 0 : i32
    %c0_i32_0 = arith.constant 0 : i32
    %c0_i32_1 = arith.constant 0 : i32
    return %c0_i32, %c0_i32_0 : i32, i32
  }
  func.func @transform_2(%arg0: i32) -> (i32, i32) {
    %c0_i32 = arith.constant 0 : i32
    %c0_i32_0 = arith.constant 0 : i32
    %c0_i32_1 = arith.constant 0 : i32
    return %c0_i32, %c0_i32_0 : i32, i32
  }
  func.func @transform_3(%arg0: i32) -> (i32, i32) {
    %c0_i32 = arith.constant 0 : i32
    %c0_i32_0 = arith.constant 0 : i32
    %c0_i32_1 = arith.constant 0 : i32
    return %c0_i32, %c0_i32_0 : i32, i32
  }
  func.func @transform_4(%arg0: i32) -> (i32, i32) {
    %c0_i32 = arith.constant 0 : i32
    %c0_i32_0 = arith.constant 0 : i32
    %c0_i32_1 = arith.constant 0 : i32
    return %c0_i32, %c0_i32_0 : i32, i32
  }
  func.func @transform_5(%arg0: i32) -> (i32, i32) {
    %c0_i32 = arith.constant 0 : i32
    %c0_i32_0 = arith.constant 0 : i32
    %c0_i32_1 = arith.constant 0 : i32
    return %c0_i32, %c0_i32_0 : i32, i32
  }
  func.func @transform_6(%arg0: i32) -> (i32, i32) {
    %c0_i32 = arith.constant 0 : i32
    %c0_i32_0 = arith.constant 0 : i32
    return %arg0, %c0_i32 : i32, i32
  }
}

</mosaic_0001>

<llo_original>
// kernel: tile.18
$region0: #{tile.18}
  #allocation0 [shape = 's32[1]{0}', space=sflag, size = 0x4, scoped, tag = 'scoped memory for tile.18']
  %s0 = inlined_call_operand.vmem [shape: f32[8], index: 0, kind: input, shape index: {}]
  %s1 = inlined_call_operand.vmem [shape: f32[16,8], index: 1, kind: output, shape index: {}]
  // Predicated region
  $region2: #{tile.18} parent=0 // pred_check
    _
  $region3: #{tile.18} parent=0 // pred_check_branch
    %3 = sbr.rel (0) target = $region5
  $region4: #{tile.18} parent=0 // pred_region
    _
  $region5: #{tile.18} parent=0 // pred_fallthru
    _
  %v4 = vld [vmem:[%s0] ss:$0 sm:$0xff]
  %5 = vst [vmem:[%s1] sm:$0xff] %v4
  %s6 = scalar_lea.vmem %s1, 8
  %7 = vst [vmem:[%s6] sm:$0xff] %v4

// kernel: tile.19
$region0: #{tile.19}
  %s0 = inlined_call_operand.vmem [shape: f32[16,8], index: 0, kind: input, shape index: {}]
  %s1 = inlined_call_operand.hbm [shape: f32[1,128], index: 1, kind: output, shape index: {}]
  $region1: #{tile.19} parent=0
    #allocation0 [shape = 'u8[512]{0}', space=vmem, size = 0x400, scoped, tag = 'operand span for operand 1']
    #allocation1 [shape = 's32[1]{0}', space=sflag, size = 0x4, scoped, tag = 'scoped memory for tile.19']
    #allocation2 [shape = 'u8[4096]{0}', space=vmem, size = 0x1000, scoped, tag = 'scoped mem for output reshape']
    %2 = vsyncpa [#allocation1], 0
    %v3 = vld [vmem:[%s0] sm:$0x1]
    %vm4 = vcmask 64512
    %5 = vst.msk [vmem:[#allocation2] sm:$0x1] %vm4, %v3
    %s6 = scalar_lea.vmem %s0, 15
    %v7 = vld [vmem:[%s6] sm:$0x1]
    %8 = vrot.lane.b32.xlu0 %v7, 120
    %v9 = vpop.permute.xlu0 %8
    %vm10 = vcmask 1048512
    %11 = vst.msk [vmem:[#allocation2] sm:$0x1] %vm10, %v9
    %s12 = scalar_lea.vmem %s0, 14
    %v13 = vld [vmem:[%s12] sm:$0x1]
    %14 = vrot.lane.b32.xlu0 %v13, 112
    %v15 = vpop.permute.xlu0 %14
    %vm16 = vcmask 982912
    %17 = vst.msk [vmem:[#allocation2] sm:$0x1] %vm16, %v15
    %s18 = scalar_lea.vmem %s0, 13
    %v19 = vld [vmem:[%s18] sm:$0x1]
    %20 = vrot.lane.b32.xlu0 %v19, 104
    %v21 = vpop.permute.xlu0 %20
    %vm22 = vcmask 917312
    %23 = vst.msk [vmem:[#allocation2] sm:$0x1] %vm22, %v21
    %s24 = scalar_lea.vmem %s0, 12
    %v25 = vld [vmem:[%s24] sm:$0x1]
    %26 = vrot.lane.b32.xlu0 %v25, 96
    %v27 = vpop.permute.xlu0 %26
    %vm28 = vcmask 851712
    %29 = vst.msk [vmem:[#allocation2] sm:$0x1] %vm28, %v27
    %s30 = scalar_lea.vmem %s0, 11
    %v31 = vld [vmem:[%s30] sm:$0x1]
    %32 = vrot.lane.b32.xlu0 %v31, 88
    %v33 = vpop.permute.xlu0 %32
    %vm34 = vcmask 786112
    %35 = vst.msk [vmem:[#allocation2] sm:$0x1] %vm34, %v33
    %s36 = scalar_lea.vmem %s0, 10
    %v37 = vld [vmem:[%s36] sm:$0x1]
    %38 = vrot.lane.b32.xlu0 %v37, 80
    %v39 = vpop.permute.xlu0 %38
    %vm40 = vcmask 720512
    %41 = vst.msk [vmem:[#allocation2] sm:$0x1] %vm40, %v39
    %s42 = scalar_lea.vmem %s0, 9
    %v43 = vld [vmem:[%s42] sm:$0x1]
    %44 = vrot.lane.b32.xlu0 %v43, 72
    %v45 = vpop.permute.xlu0 %44
    %vm46 = vcmask 654912
    %47 = vst.msk [vmem:[#allocation2] sm:$0x1] %vm46, %v45
    %s48 = scalar_lea.vmem %s0, 8
    %v49 = vld [vmem:[%s48] sm:$0x1]
    %50 = vrot.lane.b32.xlu0 %v49, 64
    %v51 = vpop.permute.xlu0 %50
    %vm52 = vcmask 589312
    %53 = vst.msk [vmem:[#allocation2] sm:$0x1] %vm52, %v51
    %s54 = scalar_lea.vmem %s0, 7
    %v55 = vld [vmem:[%s54] sm:$0x1]
    %56 = vrot.lane.b32.xlu0 %v55, 56
    %v57 = vpop.permute.xlu0 %56
    %vm58 = vcmask 523712
    %59 = vst.msk [vmem:[#allocation2] sm:$0x1] %vm58, %v57
    %s60 = scalar_lea.vmem %s0, 6
    %v61 = vld [vmem:[%s60] sm:$0x1]
    %62 = vrot.lane.b32.xlu0 %v61, 48
    %v63 = vpop.permute.xlu0 %62
    %vm64 = vcmask 458112
    %65 = vst.msk [vmem:[#allocation2] sm:$0x1] %vm64, %v63
    %s66 = scalar_lea.vmem %s0, 5
    %v67 = vld [vmem:[%s66] sm:$0x1]
    %68 = vrot.lane.b32.xlu0 %v67, 40
    %v69 = vpop.permute.xlu0 %68
    %vm70 = vcmask 392512
    %71 = vst.msk [vmem:[#allocation2] sm:$0x1] %vm70, %v69
    %s72 = scalar_lea.vmem %s0, 4
    %v73 = vld [vmem:[%s72] sm:$0x1]
    %74 = vrot.lane.b32.xlu0 %v73, 32
    %v75 = vpop.permute.xlu0 %74
    %vm76 = vcmask 326912
    %77 = vst.msk [vmem:[#allocation2] sm:$0x1] %vm76, %v75
    %s78 = scalar_lea.vmem %s0, 3
    %v79 = vld [vmem:[%s78] sm:$0x1]
    %80 = vrot.lane.b32.xlu0 %v79, 24
    %v81 = vpop.permute.xlu0 %80
    %vm82 = vcmask 261312
    %83 = vst.msk [vmem:[#allocation2] sm:$0x1] %vm82, %v81
    %s84 = scalar_lea.vmem %s0, 2
    %v85 = vld [vmem:[%s84] sm:$0x1]
    %86 = vrot.lane.b32.xlu0 %v85, 16
    %v87 = vpop.permute.xlu0 %86
    %vm88 = vcmask 195712
    %89 = vst.msk [vmem:[#allocation2] sm:$0x1] %vm88, %v87
    %s90 = scalar_lea.vmem %s0, 1
    %v91 = vld [vmem:[%s90] sm:$0x1]
    %92 = vrot.lane.b32.xlu0 %v91, 8
    %v93 = vpop.permute.xlu0 %92
    %vm94 = vcmask 130112
    %95 = vst.msk [vmem:[#allocation2] sm:$0x1] %vm94, %v93
    %s97 = sshllo.u32 0, 1
    %v99 = vld [vmem:[#allocation2] sm:%s97]
    %s100 = sshllo.u32 0, 1
    %101 = vst [vmem:[#allocation0] sm:%s100] %v99
    %s103 = ssub.s32 16, 16
    %104 = vsyncadd [#allocation1], %s103
    %s106 = sshll.u32 [#allocation0], 4
    %s107 = int_to_ptr.vmem [resolvable:$true] %s106
    %109 = dma.vmem_to_hbm [thread:$0]  %s107, 16, %s1, [#allocation1]
    %110 = dma.done [#allocation1], 16
    %111 = vsyncpa [#allocation1], 1

// kernel: double_conv.1
$region0: #{double_conv.1}
  #allocation0 [shape = 'u32[]', space=smem, size = 0x4, offset = 0x4, fixed_abs, tag = 'smem constant byte address 0x4 - core index']
  #allocation1 [shape = 'u32[144,128]{1,0:T(1,128)}', space=vmem, size = 0x12000, scoped, tag = 'internal scratch']
  %s0 = inlined_call_operand.hbm [shape: bf16[32,64], index: 0, kind: input, shape index: {}]
  %s1 = inlined_call_operand.hbm [shape: bf16[192,128], index: 1, kind: input, shape index: {}]
  %s2 = inlined_call_operand.hbm [shape: f32[1,128], index: 2, kind: input, shape index: {}]
  %s3 = inlined_call_operand.hbm [shape: f32[1,128], index: 3, kind: input, shape index: {}]
  %s4 = inlined_call_operand.hbm [shape: bf16[384,128], index: 4, kind: input, shape index: {}]
  %s5 = inlined_call_operand.hbm [shape: f32[1,128], index: 5, kind: input, shape index: {}]
  %s6 = inlined_call_operand.hbm [shape: f32[32,128], index: 6, kind: output, shape index: {}]
  %s7 = sld [smem:[#allocation0]]
  $region58: #{double_conv.1} parent=0
    _
  %s9 = ssub.s32 1, %s7
  %s10 = scalar_select 0, %s9, %s7
  $region1: #{double_conv.1} parent=0
    #allocation2 [shape = 'u8[8192]{0}', space=vmem, size = 0x2000, scoped, tag = 'input window, operand 0, single buffered']
    #allocation3 [shape = 's32[1]{0}', space=sflag, size = 0x4, scoped, tag = 'scoped memory for double_conv.1']
    #allocation4 [shape = 's32[1]{0}', space=sflag, size = 0x4, scoped, tag = 'scoped memory for double_conv.1']
    #allocation5 [shape = 'u8[49152]{0}', space=vmem, size = 0xc000, scoped, tag = 'input window, operand 1, single buffered']
    #allocation6 [shape = 's32[1]{0}', space=sflag, size = 0x4, scoped, tag = 'scoped memory for double_conv.1']
    #allocation7 [shape = 'u8[512]{0}', space=vmem, size = 0x400, scoped, tag = 'input window, operand 2, single buffered']
    #allocation8 [shape = 'u8[512]{0}', space=vmem, size = 0x400, scoped, tag = 'input window, operand 3, single buffered']
    #allocation9 [shape = 's32[1]{0}', space=sflag, size = 0x4, scoped, tag = 'scoped memory for double_conv.1']
    #allocation10 [shape = 'u8[98304]{0}', space=vmem, size = 0x18000, scoped, tag = 'input window, operand 4, single buffered']
    #allocation11 [shape = 'u8[512]{0}', space=vmem, size = 0x400, scoped, tag = 'input window, operand 5, single buffered']
    #allocation12 [shape = 's32[1]{0}', space=sflag, size = 0x4, scoped, tag = 'scoped memory for double_conv.1']
    #allocation13 [shape = 'u8[16384]{0}', space=vmem, size = 0x4000, scoped, tag = 'output window, operand 0, single buffered']
    %11 = vsyncpa [#allocation3], 0
    %12 = vsyncpa [#allocation6], 0
    %13 = vsyncpa [#allocation9], 0
    %14 = vsyncpa [#allocation12], 0
    %15 = vsyncpa [#allocation4], 0
    // Predicated region
    $region2: #{double_conv.1} parent=1 // pred_check
      _
    $region3: #{double_conv.1} parent=1 // pred_check_branch
      %17 = sbr.rel (0) target = $region5
    $region4: #{double_conv.1} parent=1 // pred_region
      %s19 = ssub.s32 256, 256
      %20 = vsyncadd [#allocation3], %s19
      %s21 = sshll.u32 [#allocation2], 4
      %s22 = int_to_ptr.vmem [resolvable:$true] %s21
      %27 = dma.hbm_to_vmem [thread:$0]  %s0, 256, %s22, [#allocation3], 64, 64, 4
    $region5: #{double_conv.1} parent=1 // pred_fallthru
      _
    // Predicated region
    $region6: #{double_conv.1} parent=1 // pred_check
      _
    $region7: #{double_conv.1} parent=1 // pred_check_branch
      %29 = sbr.rel (0) target = $region9
    $region8: #{double_conv.1} parent=1 // pred_region
      %s31 = ssub.s32 1536, 1536
      %32 = vsyncadd [#allocation6], %s31
      %s33 = sshll.u32 [#allocation5], 4
      %s34 = int_to_ptr.vmem [resolvable:$true] %s33
      %39 = dma.hbm_to_vmem [thread:$0]  %s1, 1536, %s34, [#allocation6], 64, 64, 4
    $region9: #{double_conv.1} parent=1 // pred_fallthru
      _
    // Predicated region
    $region10: #{double_conv.1} parent=1 // pred_check
      _
    $region11: #{double_conv.1} parent=1 // pred_check_branch
      %41 = sbr.rel (0) target = $region13
    $region12: #{double_conv.1} parent=1 // pred_region
      %s43 = ssub.s32 16, 16
      %44 = vsyncadd [#allocation6], %s43
      %s46 = sshll.u32 [#allocation7], 4
      %s47 = int_to_ptr.vmem [resolvable:$true] %s46
      %49 = dma.hbm_to_vmem [thread:$0]  %s2, 16, %s47, [#allocation6]
    $region13: #{double_conv.1} parent=1 // pred_fallthru
      _
    // Predicated region
    $region14: #{double_conv.1} parent=1 // pred_check
      _
    $region15: #{double_conv.1} parent=1 // pred_check_branch
      %51 = sbr.rel (0) target = $region17
    $region16: #{double_conv.1} parent=1 // pred_region
      %s53 = ssub.s32 16, 16
      %54 = vsyncadd [#allocation9], %s53
      %s56 = sshll.u32 [#allocation8], 4
      %s57 = int_to_ptr.vmem [resolvable:$true] %s56
      %59 = dma.hbm_to_vmem [thread:$0]  %s3, 16, %s57, [#allocation9]
    $region17: #{double_conv.1} parent=1 // pred_fallthru
      _
    // Predicated region
    $region18: #{double_conv.1} parent=1 // pred_check
      _
    $region19: #{double_conv.1} parent=1 // pred_check_branch
      %61 = sbr.rel (0) target = $region21
    $region20: #{double_conv.1} parent=1 // pred_region
      %s63 = ssub.s32 3072, 3072
      %64 = vsyncadd [#allocation9], %s63
      %s65 = sshll.u32 [#allocation10], 4
      %s66 = int_to_ptr.vmem [resolvable:$true] %s65
      %71 = dma.hbm_to_vmem [thread:$0]  %s4, 3072, %s66, [#allocation9], 64, 64, 4
    $region21: #{double_conv.1} parent=1 // pred_fallthru
      _
    // Predicated region
    $region22: #{double_conv.1} parent=1 // pred_check
      _
    $region23: #{double_conv.1} parent=1 // pred_check_branch
      %73 = sbr.rel (0) target = $region25
    $region24: #{double_conv.1} parent=1 // pred_region
      %s75 = ssub.s32 16, 16
      %76 = vsyncadd [#allocation12], %s75
      %s78 = sshll.u32 [#allocation11], 4
      %s79 = int_to_ptr.vmem [resolvable:$true] %s78
      %81 = dma.hbm_to_vmem [thread:$0]  %s5, 16, %s79, [#allocation12]
    $region25: #{double_conv.1} parent=1 // pred_fallthru
      _
    // Predicated region
    $region26: #{double_conv.1} parent=1 // pred_check
      _
    $region27: #{double_conv.1} parent=1 // pred_check_branch
      %83 = sbr.rel (0) target = $region29
    $region28: #{double_conv.1} parent=1 // pred_region
      %84 = dma.done [#allocation3], 256
    $region29: #{double_conv.1} parent=1 // pred_fallthru
      _
    // Predicated region
    $region30: #{double_conv.1} parent=1 // pred_check
      _
    $region31: #{double_conv.1} parent=1 // pred_check_branch
      %86 = sbr.rel (0) target = $region33
    $region32: #{double_conv.1} parent=1 // pred_region
      %87 = dma.done [#allocation6], 1536
    $region33: #{double_conv.1} parent=1 // pred_fallthru
      _
    // Predicated region
    $region34: #{double_conv.1} parent=1 // pred_check
      _
    $region35: #{double_conv.1} parent=1 // pred_check_branch
      %89 = sbr.rel (0) target = $region37
    $region36: #{double_conv.1} parent=1 // pred_region
      %90 = dma.done [#allocation6], 16
    $region37: #{double_conv.1} parent=1 // pred_fallthru
      _
    // Predicated region
    $region38: #{double_conv.1} parent=1 // pred_check
      _
    $region39: #{double_conv.1} parent=1 // pred_check_branch
      %92 = sbr.rel (0) target = $region41
    $region40: #{double_conv.1} parent=1 // pred_region
      %93 = dma.done [#allocation9], 16
    $region41: #{double_conv.1} parent=1 // pred_fallthru
      _
    // Predicated region
    $region42: #{double_conv.1} parent=1 // pred_check
      _
    $region43: #{double_conv.1} parent=1 // pred_check_branch
      %95 = sbr.rel (0) target = $region45
    $region44: #{double_conv.1} parent=1 // pred_region
      %96 = dma.done [#allocation9], 3072
    $region45: #{double_conv.1} parent=1 // pred_fallthru
      _
    // Predicated region
    $region46: #{double_conv.1} parent=1 // pred_check
      _
    $region47: #{double_conv.1} parent=1 // pred_check_branch
      %98 = sbr.rel (0) target = $region49
    $region48: #{double_conv.1} parent=1 // pred_region
      %99 = dma.done [#allocation12], 16
    $region49: #{double_conv.1} parent=1 // pred_fallthru
      _
    %v101 = vlaneseq
    %v102 = vshrl.u32 %v101, 7
    %v103 = vadd.s32 %v102, 8
    %v104 = vadd.s32 %v102, 16
    %v105 = vadd.s32 %v102, 24
    %vm106 = vcmp.lt.s32.totalorder %v102, 0
    %v107 = vsub.s32 0, %v102
    %v108 = vsel %vm106, %v107, %v102
    %v109 = vshrl.u32 %v108, 4
    %v110 = vand.u32 %v108, 15
    %v111 = vsub.s32 0, %v110
    %v112 = vsel %vm106, %v111, %v110
    %vm113 = vcmp.lt.s32.totalorder %v103, 0
    %v114 = vsub.s32 0, %v103
    %v115 = vsel %vm113, %v114, %v103
    %v116 = vshrl.u32 %v115, 4
    %v117 = vand.u32 %v115, 15
    %v118 = vsub.s32 0, %v117
    %v119 = vsel %vm113, %v118, %v117
    %vm120 = vcmp.lt.s32.totalorder %v104, 0
    %v121 = vsub.s32 0, %v104
    %v122 = vsel %vm120, %v121, %v104
    %v123 = vshrl.u32 %v122, 4
    %v124 = vand.u32 %v122, 15
    %v125 = vsub.s32 0, %v124
    %v126 = vsel %vm120, %v125, %v124
    %vm127 = vcmp.lt.s32.totalorder %v105, 0
    %v128 = vsub.s32 0, %v105
    %v129 = vsel %vm127, %v128, %v105
    %v130 = vshrl.u32 %v129, 4
    %v131 = vand.u32 %v129, 15
    %v132 = vsub.s32 0, %v131
    %v133 = vsel %vm127, %v132, %v131
    %vm134 = vcmp.ne.s32.totalorder %v112, 0
    %vm135 = vcmp.ne.s32.totalorder %v119, 0
    %vm136 = vcmp.ne.s32.totalorder %v126, 0
    %vm137 = vcmp.ne.s32.totalorder %v133, 0
    %vm138 = vcmp.lt.s32.totalorder %v112, 0
    %vm139 = vcmp.lt.s32.totalorder %v119, 0
    %vm140 = vcmp.lt.s32.totalorder %v126, 0
    %vm141 = vcmp.lt.s32.totalorder %v133, 0
    %vm142 = vmand %vm138, %vm134
    %vm143 = vmand %vm139, %vm135
    %vm144 = vmand %vm140, %vm136
    %vm145 = vmand %vm141, %vm137
    %v146 = vadd.s32 %v112, 16
    %v147 = vadd.s32 %v119, 16
    %v148 = vadd.s32 %v126, 16
    %v149 = vadd.s32 %v133, 16
    %v150 = vsel %vm142, %v146, %v112
    %v151 = vsel %vm143, %v147, %v119
    %v152 = vsel %vm144, %v148, %v126
    %v153 = vsel %vm145, %v149, %v133
    %vm154 = vcmp.eq.s32.totalorder %v150, 0
    %vm155 = vcmp.eq.s32.totalorder %v151, 0
    %vm156 = vcmp.eq.s32.totalorder %v152, 0
    %vm157 = vcmp.eq.s32.totalorder %v153, 0
    %vm158 = vcmp.eq.s32.totalorder %v150, 15
    %vm159 = vcmp.eq.s32.totalorder %v151, 15
    %vm160 = vcmp.eq.s32.totalorder %v152, 15
    %vm161 = vcmp.eq.s32.totalorder %v153, 15
    %v162 = vld [vmem:[#allocation2] sm:$0xf]
    %v163 = vld [vmem:[#allocation2 + $0x4] sm:$0xf]
    %v164 = vld [vmem:[#allocation2 + $0x8] sm:$0xf]
    %v165 = vld [vmem:[#allocation2 + $0xc] sm:$0xf]
    %v166 = vunpack.c.l.bf16 %v162
    %v167 = vunpack.c.l.bf16 %v163
    %v168 = vunpack.c.l.bf16 %v164
    %v169 = vunpack.c.l.bf16 %v165
    %v170 = vrot.slane %v166, 7
    %v171 = vrot.slane %v167, 7
    %v172 = vrot.slane %v168, 7
    %v173 = vrot.slane %v169, 7
    %vm174 = vcmp.lt.s32.totalorder %v102, 1
    %v175 = vsel %vm174, %v172, %v173
    %v176 = vsel %vm174, %v171, %v172
    %v177 = vsel %vm174, %v170, %v171
    %v178 = vsel %vm174, %v173, %v170
    %v179 = vsel %vm154, 1, 0
    %v180 = vsel %vm155, 1, 0
    %v181 = vsel %vm156, 1, 0
    %v182 = vsel %vm157, 1, 0
    %vm183 = vcmp.eq.s32.totalorder %v179, 1
    %vm184 = vcmp.eq.s32.totalorder %v180, 1
    %vm185 = vcmp.eq.s32.totalorder %v181, 1
    %vm186 = vcmp.eq.s32.totalorder %v182, 1
    %v187 = vsel %vm183, 0.0, %v178
    %v188 = vsel %vm184, 0.0, %v177
    %v189 = vsel %vm185, 0.0, %v176
    %v190 = vsel %vm186, 0.0, %v175
    %v191 = vrot.slane %v166, 1
    %v192 = vrot.slane %v167, 1
    %v193 = vrot.slane %v168, 1
    %v194 = vrot.slane %v169, 1
    %vm195 = vcmp.lt.s32.totalorder %v102, 7
    %v196 = vsel %vm195, %v193, %v194
    %v197 = vsel %vm195, %v192, %v193
    %v198 = vsel %vm195, %v191, %v192
    %v199 = vsel %vm195, %v194, %v191
    %v200 = vsel %vm158, 1, 0
    %v201 = vsel %vm159, 1, 0
    %v202 = vsel %vm160, 1, 0
    %v203 = vsel %vm161, 1, 0
    %vm204 = vcmp.eq.s32.totalorder %v200, 1
    %vm205 = vcmp.eq.s32.totalorder %v201, 1
    %vm206 = vcmp.eq.s32.totalorder %v202, 1
    %vm207 = vcmp.eq.s32.totalorder %v203, 1
    %v208 = vsel %vm204, 0.0, %v198
    %v209 = vsel %vm205, 0.0, %v197
    %v210 = vsel %vm206, 0.0, %v196
    %v211 = vsel %vm207, 0.0, %v199
    %216 = vrot.lane.b32.xlu0 %v166, 64
    %v217 = vpop.permute.xlu0 %216
    %218 = vrot.lane.b32.xlu0 %v167, 64
    %v219 = vpop.permute.xlu0 %218
    %220 = vrot.lane.b32.xlu0 %v168, 64
    %v221 = vpop.permute.xlu0 %220
    %222 = vrot.lane.b32.xlu0 %v169, 64
    %v223 = vpop.permute.xlu0 %222
    %vm228 = vcmask 523264
    %v229 = vsel %vm228, %v187, %v217
    %v230 = vsel %vm228, %v188, %v219
    %v231 = vsel %vm228, %v189, %v221
    %v232 = vsel %vm228, %v190, %v223
    %v233 = vpack.c.bf16 %v230, %v229
    %v234 = vpack.c.bf16 %v209, %v208
    %v235 = vpack.c.bf16 %v232, %v231
    %v236 = vpack.c.bf16 %v211, %v210
    %v237 = vld [vmem:[#allocation5] sm:$0xf]
    %v238 = vld [vmem:[#allocation5 + $0x4] sm:$0xf]
    %v239 = vld [vmem:[#allocation5 + $0x8] sm:$0xf]
    %v240 = vld [vmem:[#allocation5 + $0xc] sm:$0xf]
    %v241 = vld [vmem:[#allocation5 + $0x10] sm:$0xf]
    %v242 = vld [vmem:[#allocation5 + $0x14] sm:$0xf]
    %v243 = vld [vmem:[#allocation5 + $0x18] sm:$0xf]
    %v244 = vld [vmem:[#allocation5 + $0x1c] sm:$0xf]
    %v245 = vld [vmem:[#allocation5 + $0x20] sm:$0xf]
    %v246 = vld [vmem:[#allocation5 + $0x24] sm:$0xf]
    %v247 = vld [vmem:[#allocation5 + $0x28] sm:$0xf]
    %v248 = vld [vmem:[#allocation5 + $0x2c] sm:$0xf]
    %v249 = vld [vmem:[#allocation5 + $0x30] sm:$0xf]
    %v250 = vld [vmem:[#allocation5 + $0x34] sm:$0xf]
    %v251 = vld [vmem:[#allocation5 + $0x38] sm:$0xf]
    %v252 = vld [vmem:[#allocation5 + $0x3c] sm:$0xf]
    %v253 = vld [vmem:[#allocation5 + $0x40] sm:$0xf]
    %v254 = vld [vmem:[#allocation5 + $0x44] sm:$0xf]
    %v255 = vld [vmem:[#allocation5 + $0x48] sm:$0xf]
    %v256 = vld [vmem:[#allocation5 + $0x4c] sm:$0xf]
    %v257 = vld [vmem:[#allocation5 + $0x50] sm:$0xf]
    %v258 = vld [vmem:[#allocation5 + $0x54] sm:$0xf]
    %v259 = vld [vmem:[#allocation5 + $0x58] sm:$0xf]
    %v260 = vld [vmem:[#allocation5 + $0x5c] sm:$0xf]
    %v285 = vunpack.c.l.b16 %v237
    %v286 = vunpack.c.l.b16 %v238
    %v287 = vunpack.c.l.b16 %v239
    %v288 = vunpack.c.l.b16 %v240
    %v289 = vunpack.c.l.b16 %v241
    %v290 = vunpack.c.l.b16 %v242
    %v291 = vunpack.c.l.b16 %v243
    %v292 = vunpack.c.l.b16 %v244
    %v293 = vunpack.c.l.b16 %v245
    %v294 = vunpack.c.l.b16 %v246
    %v295 = vunpack.c.l.b16 %v247
    %v296 = vunpack.c.l.b16 %v248
    %v297 = vunpack.c.l.b16 %v249
    %v298 = vunpack.c.l.b16 %v250
    %v299 = vunpack.c.l.b16 %v251
    %v300 = vunpack.c.l.b16 %v252
    %v301 = vunpack.c.l.b16 %v253
    %v302 = vunpack.c.l.b16 %v254
    %v303 = vunpack.c.l.b16 %v255
    %v304 = vunpack.c.l.b16 %v256
    %v305 = vunpack.c.l.b16 %v257
    %v306 = vunpack.c.l.b16 %v258
    %v307 = vunpack.c.l.b16 %v259
    %v308 = vunpack.c.l.b16 %v260
    %v309 = vpack.c.b16 %v286, %v285
    %v310 = vpack.c.b16 %v288, %v287
    %v311 = vpack.c.b16 %v290, %v289
    %v312 = vpack.c.b16 %v292, %v291
    %v313 = vpack.c.b16 %v294, %v293
    %v314 = vpack.c.b16 %v296, %v295
    %v315 = vpack.c.b16 %v298, %v297
    %v316 = vpack.c.b16 %v300, %v299
    %v317 = vpack.c.b16 %v302, %v301
    %v318 = vpack.c.b16 %v304, %v303
    %v319 = vpack.c.b16 %v306, %v305
    %v320 = vpack.c.b16 %v308, %v307
    %v334 = vsel %vm228, %v234, 0
    %v337 = vsel %vm228, %v236, 0
    %339 = vmatprep.subr.bf16.mxu0 0
    %340 = vmatpush1.bf16.msra.mxu0 %v309
    %341 = vmatprep.subr.bf16.mxu0 0
    %342 = vmatpush1.bf16.msra.mxu0 %v310
    %343 = vmatprep.subr.bf16.mxu0 0
    %344 = vmatpush1.bf16.msra.mxu0 %v311
    %345 = vmatprep.subr.bf16.mxu0 0
    %346 = vmatpush1.bf16.msra.mxu0 %v312
    %347 = vmatprep.subr.bf16.mxu0 0
    %348 = vmatpush1.bf16.msra.mxu0 %v313
    %349 = vmatprep.subr.bf16.mxu0 0
    %350 = vmatpush1.bf16.msra.mxu0 %v314
    %351 = vmatprep.subr.bf16.mxu0 0
    %352 = vmatpush1.bf16.msra.mxu0 %v315
    %353 = vmatprep.subr.bf16.mxu0 0
    %354 = vmatpush1.bf16.msra.mxu0 %v316
    %355 = vmatprep.subr.bf16.mxu0 0
    %356 = vmatpush1.bf16.msra.mxu0 %v317
    %357 = vmatprep.subr.bf16.mxu0 0
    %358 = vmatpush1.bf16.msra.mxu0 %v318
    %359 = vmatprep.subr.bf16.mxu0 0
    %360 = vmatpush1.bf16.msra.mxu0 %v319
    %361 = vmatprep.subr.bf16.mxu0 0
    %362 = vmatpush1.bf16.msra.mxu0 %v320
    %363 = vmatprep.subr.bf16.mxu0 0
    %364 = vmatpush1.bf16.msra.mxu0 0
    %365 = vmatprep.subr.bf16.mxu0 0
    %366 = vmatpush1.bf16.msra.mxu0 0
    %367 = vmatprep.subr.bf16.mxu0 0
    %368 = vmatpush1.bf16.msra.mxu0 0
    %369 = vmatprep.subr.bf16.mxu0 0
    %370 = vmatpush1.bf16.msra.mxu0 0
    %371 = vmatprep.mubr.bf16.mxu0 %v334
    %372 = vmatmul.mubr.bf16.gmra.mrb[0].mxu0 %v233
    %v373 = vpop.f32.mrb[0].mxu0
    %v374 = vadd.f32 0.0, %v373
    %v375 = vpop.f32.mrb[0].mxu0
    %v376 = vpop.f32.mrb[0].mxu0
    %v377 = vadd.f32 0.0, %v376
    %v378 = vpop.f32.mrb[0].mxu0
    %379 = vmatprep.mubr.bf16.mxu0 %v337
    %380 = vmatmul.mubr.bf16.gmra.mrb[0].mxu0 %v235
    %v381 = vpop.f32.mrb[0].mxu0
    %v382 = vadd.f32 0.0, %v381
    %v383 = vpop.f32.mrb[0].mxu0
    %v384 = vpop.f32.mrb[0].mxu0
    %v385 = vadd.f32 0.0, %v384
    %v386 = vpop.f32.mrb[0].mxu0
    %387 = vdwg.mxu0
    %v388 = vld [vmem:[#allocation7] sm:$0x1]
    %v390 = vlaneseq
    %v391 = vshrl.u32 %v390, 7
    %v392 = vsub.s32 0, %v391
    %v393 = vrot.slane %v388, %v392
    %v395 = vmul.f32 %v374, %v393
    %v396 = vmul.f32 %v377, %v393
    %v397 = vmul.f32 %v382, %v393
    %v398 = vmul.f32 %v385, %v393
    %v399 = vld [vmem:[#allocation8] sm:$0x1]
    %v401 = vlaneseq
    %v402 = vshrl.u32 %v401, 7
    %v403 = vsub.s32 0, %v402
    %v404 = vrot.slane %v399, %v403
    %v406 = vadd.f32 %v395, %v404
    %v407 = vadd.f32 %v396, %v404
    %v408 = vadd.f32 %v397, %v404
    %v409 = vadd.f32 %v398, %v404
    %v410 = vmax.f32 %v406, 0.0
    %v411 = vmax.f32 %v407, 0.0
    %v412 = vmax.f32 %v408, 0.0
    %v413 = vmax.f32 %v409, 0.0
    %v414 = vrot.slane %v410, 7
    %v415 = vrot.slane %v411, 7
    %v416 = vrot.slane %v412, 7
    %v417 = vrot.slane %v413, 7
    %v418 = vsel %vm174, %v416, %v417
    %v419 = vsel %vm174, %v415, %v416
    %v420 = vsel %vm174, %v414, %v415
    %v421 = vsel %vm174, %v417, %v414
    %v422 = vsel %vm183, 0.0, %v421
    %v423 = vsel %vm184, 0.0, %v420
    %v424 = vsel %vm185, 0.0, %v419
    %v425 = vsel %vm186, 0.0, %v418
    %v426 = vrot.slane %v410, 1
    %v427 = vrot.slane %v411, 1
    %v428 = vrot.slane %v412, 1
    %v429 = vrot.slane %v413, 1
    %v430 = vsel %vm195, %v428, %v429
    %v431 = vsel %vm195, %v427, %v428
    %v432 = vsel %vm195, %v426, %v427
    %v433 = vsel %vm195, %v429, %v426
    %v434 = vsel %vm204, 0.0, %v432
    %v435 = vsel %vm205, 0.0, %v431
    %v436 = vsel %vm206, 0.0, %v430
    %v437 = vsel %vm207, 0.0, %v433
    %v438 = vpack.c.bf16 %v423, %v422
    %v439 = vpack.c.bf16 %v411, %v410
    %v440 = vpack.c.bf16 %v435, %v434
    %v441 = vpack.c.bf16 %v425, %v424
    %v442 = vpack.c.bf16 %v413, %v412
    %v443 = vpack.c.bf16 %v437, %v436
    %v444 = vld [vmem:[#allocation10] sm:$0xf]
    %v445 = vld [vmem:[#allocation10 + $0x4] sm:$0xf]
    %v446 = vld [vmem:[#allocation10 + $0x8] sm:$0xf]
    %v447 = vld [vmem:[#allocation10 + $0xc] sm:$0xf]
    %v448 = vld [vmem:[#allocation10 + $0x10] sm:$0xf]
    %v449 = vld [vmem:[#allocation10 + $0x14] sm:$0xf]
    %v450 = vld [vmem:[#allocation10 + $0x18] sm:$0xf]
    %v451 = vld [vmem:[#allocation10 + $0x1c] sm:$0xf]
    %v452 = vld [vmem:[#allocation10 + $0x20] sm:$0xf]
    %v453 = vld [vmem:[#allocation10 + $0x24] sm:$0xf]
    %v454 = vld [vmem:[#allocation10 + $0x28] sm:$0xf]
    %v455 = vld [vmem:[#allocation10 + $0x2c] sm:$0xf]
    %v456 = vld [vmem:[#allocation10 + $0x30] sm:$0xf]
    %v457 = vld [vmem:[#allocation10 + $0x34] sm:$0xf]
    %v458 = vld [vmem:[#allocation10 + $0x38] sm:$0xf]
    %v459 = vld [vmem:[#allocation10 + $0x3c] sm:$0xf]
    %v460 = vld [vmem:[#allocation10 + $0x40] sm:$0xf]
    %v461 = vld [vmem:[#allocation10 + $0x44] sm:$0xf]
    %v462 = vld [vmem:[#allocation10 + $0x48] sm:$0xf]
    %v463 = vld [vmem:[#allocation10 + $0x4c] sm:$0xf]
    %v464 = vld [vmem:[#allocation10 + $0x50] sm:$0xf]
    %v465 = vld [vmem:[#allocation10 + $0x54] sm:$0xf]
    %v466 = vld [vmem:[#allocation10 + $0x58] sm:$0xf]
    %v467 = vld [vmem:[#allocation10 + $0x5c] sm:$0xf]
    %v468 = vld [vmem:[#allocation10 + $0x60] sm:$0xf]
    %v469 = vld [vmem:[#allocation10 + $0x64] sm:$0xf]
    %v470 = vld [vmem:[#allocation10 + $0x68] sm:$0xf]
    %v471 = vld [vmem:[#allocation10 + $0x6c] sm:$0xf]
    %v472 = vld [vmem:[#allocation10 + $0x70] sm:$0xf]
    %v473 = vld [vmem:[#allocation10 + $0x74] sm:$0xf]
    %v474 = vld [vmem:[#allocation10 + $0x78] sm:$0xf]
    %v475 = vld [vmem:[#allocation10 + $0x7c] sm:$0xf]
    %v476 = vld [vmem:[#allocation10 + $0x80] sm:$0xf]
    %v477 = vld [vmem:[#allocation10 + $0x84] sm:$0xf]
    %v478 = vld [vmem:[#allocation10 + $0x88] sm:$0xf]
    %v479 = vld [vmem:[#allocation10 + $0x8c] sm:$0xf]
    %v480 = vld [vmem:[#allocation10 + $0x90] sm:$0xf]
    %v481 = vld [vmem:[#allocation10 + $0x94] sm:$0xf]
    %v482 = vld [vmem:[#allocation10 + $0x98] sm:$0xf]
    %v483 = vld [vmem:[#allocation10 + $0x9c] sm:$0xf]
    %v484 = vld [vmem:[#allocation10 + $0xa0] sm:$0xf]
    %v485 = vld [vmem:[#allocation10 + $0xa4] sm:$0xf]
    %v486 = vld [vmem:[#allocation10 + $0xa8] sm:$0xf]
    %v487 = vld [vmem:[#allocation10 + $0xac] sm:$0xf]
    %v488 = vld [vmem:[#allocation10 + $0xb0] sm:$0xf]
    %v489 = vld [vmem:[#allocation10 + $0xb4] sm:$0xf]
    %v490 = vld [vmem:[#allocation10 + $0xb8] sm:$0xf]
    %v491 = vld [vmem:[#allocation10 + $0xbc] sm:$0xf]
    %v492 = vld [vmem:[#allocation11] sm:$0x1]
    %v494 = vlaneseq
    %v495 = vshrl.u32 %v494, 7
    %v496 = vsub.s32 0, %v495
    %v497 = vrot.slane %v492, %v496
    %v547 = vunpack.c.l.b16 %v444
    %v548 = vunpack.c.l.b16 %v445
    %v549 = vunpack.c.l.b16 %v446
    %v550 = vunpack.c.l.b16 %v447
    %v551 = vunpack.c.l.b16 %v448
    %v552 = vunpack.c.l.b16 %v449
    %v553 = vunpack.c.l.b16 %v450
    %v554 = vunpack.c.l.b16 %v451
    %v555 = vunpack.c.l.b16 %v452
    %v556 = vunpack.c.l.b16 %v453
    %v557 = vunpack.c.l.b16 %v454
    %v558 = vunpack.c.l.b16 %v455
    %v559 = vunpack.c.l.b16 %v456
    %v560 = vunpack.c.l.b16 %v457
    %v561 = vunpack.c.l.b16 %v458
    %v562 = vunpack.c.l.b16 %v459
    %v563 = vunpack.c.l.b16 %v460
    %v564 = vunpack.c.l.b16 %v461
    %v565 = vunpack.c.l.b16 %v462
    %v566 = vunpack.c.l.b16 %v463
    %v567 = vunpack.c.l.b16 %v464
    %v568 = vunpack.c.l.b16 %v465
    %v569 = vunpack.c.l.b16 %v466
    %v570 = vunpack.c.l.b16 %v467
    %v571 = vunpack.c.l.b16 %v468
    %v572 = vunpack.c.l.b16 %v469
    %v573 = vunpack.c.l.b16 %v470
    %v574 = vunpack.c.l.b16 %v471
    %v575 = vunpack.c.l.b16 %v472
    %v576 = vunpack.c.l.b16 %v473
    %v577 = vunpack.c.l.b16 %v474
    %v578 = vunpack.c.l.b16 %v475
    %v579 = vunpack.c.l.b16 %v476
    %v580 = vunpack.c.l.b16 %v477
    %v581 = vunpack.c.l.b16 %v478
    %v582 = vunpack.c.l.b16 %v479
    %v583 = vunpack.c.l.b16 %v480
    %v584 = vunpack.c.l.b16 %v481
    %v585 = vunpack.c.l.b16 %v482
    %v586 = vunpack.c.l.b16 %v483
    %v587 = vunpack.c.l.b16 %v484
    %v588 = vunpack.c.l.b16 %v485
    %v589 = vunpack.c.l.b16 %v486
    %v590 = vunpack.c.l.b16 %v487
    %v591 = vunpack.c.l.b16 %v488
    %v592 = vunpack.c.l.b16 %v489
    %v593 = vunpack.c.l.b16 %v490
    %v594 = vunpack.c.l.b16 %v491
    %v595 = vpack.c.b16 %v548, %v547
    %v596 = vpack.c.b16 %v550, %v549
    %v597 = vpack.c.b16 %v552, %v551
    %v598 = vpack.c.b16 %v554, %v553
    %v599 = vpack.c.b16 %v556, %v555
    %v600 = vpack.c.b16 %v558, %v557
    %v601 = vpack.c.b16 %v560, %v559
    %v602 = vpack.c.b16 %v562, %v561
    %v603 = vpack.c.b16 %v564, %v563
    %v604 = vpack.c.b16 %v566, %v565
    %v605 = vpack.c.b16 %v568, %v567
    %v606 = vpack.c.b16 %v570, %v569
    %v607 = vpack.c.b16 %v572, %v571
    %v608 = vpack.c.b16 %v574, %v573
    %v609 = vpack.c.b16 %v576, %v575
    %v610 = vpack.c.b16 %v578, %v577
    %v611 = vpack.c.b16 %v580, %v579
    %v612 = vpack.c.b16 %v582, %v581
    %v613 = vpack.c.b16 %v584, %v583
    %v614 = vpack.c.b16 %v586, %v585
    %v615 = vpack.c.b16 %v588, %v587
    %v616 = vpack.c.b16 %v590, %v589
    %v617 = vpack.c.b16 %v592, %v591
    %v618 = vpack.c.b16 %v594, %v593
    %643 = vmatprep.subr.bf16.mxu0 0
    %644 = vmatpush1.bf16.msra.mxu0 %v595
    %645 = vmatprep.subr.bf16.mxu0 0
    %646 = vmatpush1.bf16.msra.mxu0 %v596
    %647 = vmatprep.subr.bf16.mxu0 0
    %648 = vmatpush1.bf16.msra.mxu0 %v597
    %649 = vmatprep.subr.bf16.mxu0 0
    %650 = vmatpush1.bf16.msra.mxu0 %v598
    %651 = vmatprep.subr.bf16.mxu0 0
    %652 = vmatpush1.bf16.msra.mxu0 %v599
    %653 = vmatprep.subr.bf16.mxu0 0
    %654 = vmatpush1.bf16.msra.mxu0 %v600
    %655 = vmatprep.subr.bf16.mxu0 0
    %656 = vmatpush1.bf16.msra.mxu0 %v601
    %657 = vmatprep.subr.bf16.mxu0 0
    %658 = vmatpush1.bf16.msra.mxu0 %v602
    %659 = vmatprep.subr.bf16.mxu0 0
    %660 = vmatpush1.bf16.msra.mxu0 %v603
    %661 = vmatprep.subr.bf16.mxu0 0
    %662 = vmatpush1.bf16.msra.mxu0 %v604
    %663 = vmatprep.subr.bf16.mxu0 0
    %664 = vmatpush1.bf16.msra.mxu0 %v605
    %665 = vmatprep.subr.bf16.mxu0 0
    %666 = vmatpush1.bf16.msra.mxu0 %v606
    %667 = vmatprep.subr.bf16.mxu0 0
    %668 = vmatpush1.bf16.msra.mxu0 %v607
    %669 = vmatprep.subr.bf16.mxu0 0
    %670 = vmatpush1.bf16.msra.mxu0 %v608
    %671 = vmatprep.subr.bf16.mxu0 0
    %672 = vmatpush1.bf16.msra.mxu0 %v609
    %673 = vmatprep.subr.bf16.mxu0 0
    %674 = vmatpush1.bf16.msra.mxu0 %v610
    %675 = vmatprep.mubr.bf16.mxu0 %v439
    %676 = vmatmul.mubr.bf16.gmra.mrb[0].mxu0 %v438
    %v677 = vpop.f32.mrb[0].mxu0
    %v678 = vadd.f32 %v497, %v677
    %v679 = vpop.f32.mrb[0].mxu0
    %v680 = vpop.f32.mrb[0].mxu0
    %v681 = vadd.f32 %v497, %v680
    %v682 = vpop.f32.mrb[0].mxu0
    %683 = vmatprep.mubr.bf16.mxu0 %v442
    %684 = vmatmul.mubr.bf16.gmra.mrb[0].mxu0 %v441
    %v685 = vpop.f32.mrb[0].mxu0
    %v686 = vadd.f32 %v497, %v685
    %v687 = vpop.f32.mrb[0].mxu0
    %v688 = vpop.f32.mrb[0].mxu0
    %v689 = vadd.f32 %v497, %v688
    %v690 = vpop.f32.mrb[0].mxu0
    %691 = vdwg.mxu0
    %692 = vmatprep.subr.bf16.mxu0 0
    %693 = vmatpush1.bf16.msra.mxu0 %v611
    %694 = vmatprep.subr.bf16.mxu0 0
    %695 = vmatpush1.bf16.msra.mxu0 %v612
    %696 = vmatprep.subr.bf16.mxu0 0
    %697 = vmatpush1.bf16.msra.mxu0 %v613
    %698 = vmatprep.subr.bf16.mxu0 0
    %699 = vmatpush1.bf16.msra.mxu0 %v614
    %700 = vmatprep.subr.bf16.mxu0 0
    %701 = vmatpush1.bf16.msra.mxu0 %v615
    %702 = vmatprep.subr.bf16.mxu0 0
    %703 = vmatpush1.bf16.msra.mxu0 %v616
    %704 = vmatprep.subr.bf16.mxu0 0
    %705 = vmatpush1.bf16.msra.mxu0 %v617
    %706 = vmatprep.subr.bf16.mxu0 0
    %707 = vmatpush1.bf16.msra.mxu0 %v618
    %708 = vmatprep.subr.bf16.mxu0 0
    %709 = vmatpush1.bf16.msra.mxu0 0
    %710 = vmatprep.subr.bf16.mxu0 0
    %711 = vmatpush1.bf16.msra.mxu0 0
    %712 = vmatprep.subr.bf16.mxu0 0
    %713 = vmatpush1.bf16.msra.mxu0 0
    %714 = vmatprep.subr.bf16.mxu0 0
    %715 = vmatpush1.bf16.msra.mxu0 0
    %716 = vmatprep.subr.bf16.mxu0 0
    %717 = vmatpush1.bf16.msra.mxu0 0
    %718 = vmatprep.subr.bf16.mxu0 0
    %719 = vmatpush1.bf16.msra.mxu0 0
    %720 = vmatprep.subr.bf16.mxu0 0
    %721 = vmatpush1.bf16.msra.mxu0 0
    %722 = vmatprep.subr.bf16.mxu0 0
    %723 = vmatpush1.bf16.msra.mxu0 0
    %724 = vmatprep.mubr.bf16.mxu0 0
    %725 = vmatmul.mubr.bf16.gmra.mrb[0].mxu0 %v440
    %v726 = vpop.f32.mrb[0].mxu0
    %v727 = vadd.f32 %v678, %v726
    %v728 = vpop.f32.mrb[0].mxu0
    %v729 = vpop.f32.mrb[0].mxu0
    %v730 = vadd.f32 %v681, %v729
    %v731 = vpop.f32.mrb[0].mxu0
    %732 = vmatprep.mubr.bf16.mxu0 0
    %733 = vmatmul.mubr.bf16.gmra.mrb[0].mxu0 %v443
    %v734 = vpop.f32.mrb[0].mxu0
    %v735 = vadd.f32 %v686, %v734
    %v736 = vpop.f32.mrb[0].mxu0
    %v737 = vpop.f32.mrb[0].mxu0
    %v738 = vadd.f32 %v689, %v737
    %v739 = vpop.f32.mrb[0].mxu0
    %740 = vdwg.mxu0
    %v741 = vmax.f32 %v727, 0.0
    %v742 = vmax.f32 %v730, 0.0
    %v743 = vmax.f32 %v735, 0.0
    %v744 = vmax.f32 %v738, 0.0
    %745 = vst [vmem:[#allocation13] sm:$0xff] %v741
    %746 = vst [vmem:[#allocation13 + $0x8] sm:$0xff] %v742
    %747 = vst [vmem:[#allocation13 + $0x10] sm:$0xff] %v743
    %748 = vst [vmem:[#allocation13 + $0x18] sm:$0xff] %v744
    // Predicated region
    $region50: #{double_conv.1} parent=1 // pred_check
      _
    $region51: #{double_conv.1} parent=1 // pred_check_branch
      %750 = sbr.rel (0) target = $region53
    $region52: #{double_conv.1} parent=1 // pred_region
      %s752 = ssub.s32 512, 512
      %753 = vsyncadd [#allocation4], %s752
      %s754 = sshll.u32 [#allocation13], 4
      %s755 = int_to_ptr.vmem [resolvable:$true] %s754
      %760 = dma.vmem_to_hbm [thread:$0]  %s755, 512, %s6, [#allocation4], 128, 128, 8
    $region53: #{double_conv.1} parent=1 // pred_fallthru
      _
    // Predicated region
    $region54: #{double_conv.1} parent=1 // pred_check
      _
    $region55: #{double_conv.1} parent=1 // pred_check_branch
      %762 = sbr.rel (0) target = $region57
    $region56: #{double_conv.1} parent=1 // pred_region
      %763 = dma.done [#allocation4], 512
    $region57: #{double_conv.1} parent=1 // pred_fallthru
      _
    %764 = vsyncpa [#allocation3], 1
    %765 = vsyncpa [#allocation6], 1
    %766 = vsyncpa [#allocation9], 1
    %767 = vsyncpa [#allocation12], 1
    %768 = vsyncpa [#allocation4], 1

</llo_original>
